<compile_context>
chip_gen: v6e
topology: v6e:2x2x1
jax: 0.10.0
libtpu: 0.0.40
codegen_flags: <defaults>
</compile_context>

<pallas_src>
import functools
import numpy as np

import jax
import jax.numpy as jnp
from jax.experimental import pallas as pl
from jax.experimental.pallas import tpu as pltpu


# ------------------------------------------------------------------
# Single fused kernel: one MXU dot + bias epilogue, lane-dense slabs
# ------------------------------------------------------------------
def _tt_matmul_bias_kernel(x_ref, w_ref, b_ref, o_ref):
    # Operands in the (possibly bf16) weight dtype, accumulation in f32.
    h = jnp.dot(x_ref[...].astype(w_ref.dtype), w_ref[...],
                preferred_element_type=jnp.float32)
    # Fused bias add + single full-lane store of the packed output slab.
    o_ref[...] = (h + b_ref[...]).astype(o_ref.dtype)


# ------------------------------------------------------------------
# One-time parameter preprocessing (outside the forward hot path)
# ------------------------------------------------------------------
def _pack_factor(n_total):
    """How many batch rows share one 128-lane output row."""
    if n_total < 128 and 128 % n_total == 0:
        return 128 // n_total
    return 1


def _tt_full_matrix(cores):
    """Dense matrix W [m_total, n_total] of the TT operator (out = x_flat @ W).

    Done on host in float64 so the composition itself adds no rounding.
    """
    d = len(cores)
    w = np.asarray(cores[0], dtype=np.float64)[0]            # [n1, m1, r1] (r0 == 1)
    for c in cores[1:]:
        w = np.tensordot(w, np.asarray(c, dtype=np.float64),
                         axes=([w.ndim - 1], [0]))
    w = w[..., 0]                                            # drop r_d == 1
    # axis order is (n1, m1, n2, m2, ..., nd, md) -> (n1..nd, m1..md)
    perm = [2 * k for k in range(d)] + [2 * k + 1 for k in range(d)]
    w = np.transpose(w, perm)
    n_total = int(np.prod(w.shape[:d]))
    m_total = int(np.prod(w.shape[d:]))
    return w.reshape(n_total, m_total).T                     # [m_total, n_total]


def prepare_tt_params(cores, bias, size_in, size_out, compute_dtype=jnp.float32):
    """Compose TT cores into one dense, lane-packed weight + bias row.

    Folds the "g batch rows per 128-lane output row" regrouping into the weight
    itself: block-diag(W, ..., W) maps g concatenated input rows (g*m_total
    lanes) to their g concatenated outputs (exactly 128 lanes).
    """
    m_total = int(np.prod(size_in))
    n_total = int(np.prod(size_out))
    w = _tt_full_matrix(cores)                               # [m_total, n_total], f64
    b = np.asarray(bias, dtype=np.float64).reshape(1, n_total)
    g = _pack_factor(n_total)
    if g > 1:
        w = np.kron(np.eye(g), w)                            # [g*m_total, 128]
        b = np.tile(b, (1, g))                               # [1, 128]
    # bf16 weights recommended on v6e/v7x (full-rate MXU); bias stays f32.
    return jnp.asarray(w, dtype=compute_dtype), jnp.asarray(b, dtype=jnp.float32)


# ------------------------------------------------------------------
# Forward pass: one pallas_call, batch tiled over a "parallel" grid
# ------------------------------------------------------------------
def _default_tile_b(B, g, max_tile=1024):
    """Largest batch tile (<= max_tile rows, multiple of 8*g sublane-aligned
    packed rows) that still leaves >= 2 grid tiles when the batch allows it,
    so both v7x TensorCores get work."""
    unit = 8 * g
    tile = (B // (2 * unit)) * unit
    return max(unit, min(max_tile, tile))


@functools.partial(jax.jit, static_argnames=("size_in", "size_out", "tile_b"))
def tt_linear_forward(x, w_packed, bias_packed, *, size_in, size_out, tile_b=None):
    d = len(size_in)
    batch_shape = x.shape[:x.ndim - d]
    B = int(np.prod(batch_shape)) if batch_shape else 1
    m_total = int(np.prod(size_in))
    n_total = int(np.prod(size_out))
    g = _pack_factor(n_total)
    unit = 8 * g

    if tile_b is None:
        tile_b = _default_tile_b(B, g)
    tile_b = max(unit, (tile_b // unit) * unit)              # sublane-align packed rows

    num_tiles = pl.cdiv(B, tile_b)
    b_pad = num_tiles * tile_b

    x_flat = x.reshape(B, m_total)
    if b_pad != B:                                           # guard ragged last tile
        x_flat = jnp.pad(x_flat, ((0, b_pad - B), (0, 0)))

    # Pack g batch rows per lane-dense row (row-major no-op reshape).
    rows = b_pad // g
    tile_rows = tile_b // g
    x_packed = x_flat.reshape(rows, g * m_total)

    # NOTE: weight/bias index_maps are constant, so Mosaic fetches them once;
    # at the large-mode regime also set pipeline_mode=pl.Buffered(1) on them
    # to drop the second resident buffer (matters on v7x's 64 MiB VMEM).
    out_packed = pl.pallas_call(
        _tt_matmul_bias_kernel,
        out_shape=jax.ShapeDtypeStruct((rows, g * n_total), x.dtype),
        grid=(num_tiles,),
        in_specs=[
            pl.BlockSpec((tile_rows, g * m_total), lambda i: (i, 0)),
            pl.BlockSpec(w_packed.shape, lambda i: (0, 0)),     # resident weight
            pl.BlockSpec(bias_packed.shape, lambda i: (0, 0)),  # resident bias
        ],
        out_specs=pl.BlockSpec((tile_rows, g * n_total), lambda i: (i, 0)),
        compiler_params=pltpu.CompilerParams(
            dimension_semantics=("parallel",),               # 2 TCs on v7x
            vmem_limit_bytes=32 * 1024 * 1024,               # safe on 64 MiB v7x VMEM
        ),
    )(x_packed, w_packed, bias_packed)

    out_flat = out_packed.reshape(b_pad, n_total)[:B]
    return out_flat.reshape(batch_shape + tuple(size_out))


# ------------------------------------------------------------------
# Pure-JAX reference (direct transcription of the PyTorch forward)
# ------------------------------------------------------------------
def tt_linear_ref(x, cores, bias, size_in):
    d = len(size_in)
    D = x.ndim
    result = x[..., None]
    for c in cores:
        result = jnp.tensordot(result, c, axes=([D - d, result.ndim - 1], [2, 0]))
    result = jnp.squeeze(result, -1)
    return result + bias


# ------------------------------------------------------------------
# Deterministic parameter init (He-style, approximates torchtt.randn)
# ------------------------------------------------------------------
def init_tt_params(key, size_in, size_out, rank, dtype=jnp.float32):
    d = len(size_in)
    var = 2.0 / float(np.prod(size_in))                      # 'He' initializer
    sigma = (var / float(np.prod(rank))) ** (1.0 / (2.0 * d))
    cores = []
    for k in range(d):
        key, sub = jax.random.split(key)
        shape = (rank[k], size_out[k], size_in[k], rank[k + 1])
        cores.append(sigma * jax.random.normal(sub, shape, dtype=dtype))
    bias = jnp.zeros(tuple(size_out), dtype=dtype)           # module uses zero bias
    return cores, bias


# ------------------------------------------------------------------
if __name__ == "__main__":
    size_in = (4, 8)        # M1, M2  -> m_total = 32
    size_out = (4, 4)       # N1, N2  -> n_total = 16  (g = 8, packed width 128)
    rank = (1, 3, 1)        # r0, r1, r2
    batch_shape = (4, 128)  # B = 512 -> tile_b = 256, grid = 2 ("parallel")

    key = jax.random.PRNGKey(0)
    k_param, k_x = jax.random.split(key)
    cores, bias = init_tt_params(k_param, size_in, size_out, rank)
    x = jax.random.normal(k_x, batch_shape + size_in, dtype=jnp.float32)

    ref = jax.block_until_ready(tt_linear_ref(x, cores, bias, size_in))

    # f32 operand path (exact vs reference)
    w32, b32 = prepare_tt_params(cores, bias, size_in, size_out,
                                 compute_dtype=jnp.float32)
    out = tt_linear_forward(x, w32, b32, size_in=size_in, size_out=size_out)
    out = jax.block_until_ready(out)
    assert out.shape == batch_shape + size_out, out.shape
    np.testing.assert_allclose(np.asarray(out), np.asarray(ref),
                               rtol=1e-5, atol=1e-5)

    # bf16 operand path (recommended default on v6e/v7x), f32 accumulation.
    # Single dot => no intermediate bf16 re-rounding, only weight/LHS quantization.
    w16, b16 = prepare_tt_params(cores, bias, size_in, size_out,
                                 compute_dtype=jnp.bfloat16)
    out_bf16 = tt_linear_forward(x, w16, b16, size_in=size_in, size_out=size_out)
    out_bf16 = jax.block_until_ready(out_bf16)
    np.testing.assert_allclose(np.asarray(out_bf16), np.asarray(ref),
                               rtol=5e-2, atol=5e-2)

    print("KERNEL_OK")
</pallas_src>

<mosaic_0001>
module attributes {stable_mosaic.version = 11 : i64} {
  func.func @_tt_matmul_bias_kernel(%arg0: i32, %arg1: memref<32x256xf32, #tpu.memory_space<vmem>>, %arg2: memref<256x128xf32, #tpu.memory_space<vmem>>, %arg3: memref<1x128xf32, #tpu.memory_space<vmem>>, %arg4: memref<32x128xf32, #tpu.memory_space<vmem>>) attributes {dimension_semantics = [#tpu.dimension_semantics<parallel>], iteration_bounds = array<i64: 2>, scalar_prefetch = 0 : i64, scratch_operands = 0 : i64, tpu.core_type = #tpu.core_type<tc>, window_params = [{transform_indices = @transform_0, window_bounds = array<i64: 32, 256>}, {pipeline_mode = #tpu.pipeline_mode<synchronous>, transform_indices = @transform_1, window_bounds = array<i64: 256, 128>}, {pipeline_mode = #tpu.pipeline_mode<synchronous>, transform_indices = @transform_2, window_bounds = array<i64: 1, 128>}, {transform_indices = @transform_3, window_bounds = array<i64: 32, 128>}]} {
    %c0 = arith.constant 0 : index
    %c0_0 = arith.constant 0 : index
    %0 = vector.load %arg1[%c0, %c0_0] : memref<32x256xf32, #tpu.memory_space<vmem>>, vector<32x256xf32>
    %c0_1 = arith.constant 0 : index
    %c0_2 = arith.constant 0 : index
    %1 = vector.load %arg2[%c0_1, %c0_2] : memref<256x128xf32, #tpu.memory_space<vmem>>, vector<256x128xf32>
    %cst = arith.constant dense<0.000000e+00> : vector<32x128xf32>
    %2 = tpu.matmul %0, %1, %cst {dimension_numbers = #tpu.dot_dimension_numbers<[1], [0], [0], [1], [0, 0, 1, 1], [], []>} : vector<32x256xf32>, vector<256x128xf32>, vector<32x128xf32> -> vector<32x128xf32>
    %c0_3 = arith.constant 0 : index
    %c0_4 = arith.constant 0 : index
    %3 = vector.load %arg3[%c0_3, %c0_4] : memref<1x128xf32, #tpu.memory_space<vmem>>, vector<1x128xf32>
    %4 = vector.broadcast %3 : vector<1x128xf32> to vector<32x128xf32>
    %5 = arith.addf %2, %4 : vector<32x128xf32>
    %c0_5 = arith.constant 0 : index
    %c0_6 = arith.constant 0 : index
    %6 = vector.load %arg4[%c0_5, %c0_6] : memref<32x128xf32, #tpu.memory_space<vmem>>, vector<32x128xf32>
    tpu.vector_store %arg4[%c0_5, %c0_6], %5 {strides = array<i32>} : memref<32x128xf32, #tpu.memory_space<vmem>>, vector<32x128xf32>,
    return
  }
  func.func @transform_0(%arg0: i32) -> (i32, i32) {
    %c0_i32 = arith.constant 0 : i32
    %c0_i32_0 = arith.constant 0 : i32
    return %arg0, %c0_i32 : i32, i32
  }
  func.func @transform_1(%arg0: i32) -> (i32, i32) {
    %c0_i32 = arith.constant 0 : i32
    %c0_i32_0 = arith.constant 0 : i32
    %c0_i32_1 = arith.constant 0 : i32
    return %c0_i32, %c0_i32_0 : i32, i32
  }
  func.func @transform_2(%arg0: i32) -> (i32, i32) {
    %c0_i32 = arith.constant 0 : i32
    %c0_i32_0 = arith.constant 0 : i32
    %c0_i32_1 = arith.constant 0 : i32
    return %c0_i32, %c0_i32_0 : i32, i32
  }
  func.func @transform_3(%arg0: i32) -> (i32, i32) {
    %c0_i32 = arith.constant 0 : i32
    %c0_i32_0 = arith.constant 0 : i32
    return %arg0, %c0_i32 : i32, i32
  }
}

</mosaic_0001>

<llo_original>
// kernel: tt_linear_forward.1
$region0: #{tt_linear_forward.1}
  #allocation0 [shape = 'u32[]', space=smem, size = 0x4, offset = 0x4, fixed_abs, tag = 'smem constant byte address 0x4 - core index']
  #allocation1 [shape = 'u32[144,128]{1,0:T(1,128)}', space=vmem, size = 0x12000, scoped, tag = 'internal scratch']
  %s0 = inlined_call_operand.vmem [shape: f32[64,256], index: 0, kind: input, shape index: {}]
  %s1 = inlined_call_operand.vmem [shape: f32[256,128], index: 1, kind: input, shape index: {}]
  %s2 = inlined_call_operand.vmem [shape: f32[1,128], index: 2, kind: input, shape index: {}]
  %s3 = inlined_call_operand.vmem [shape: f32[64,128], index: 3, kind: output, shape index: {}]
  %s4 = sld [smem:[#allocation0]]
  $region45: #{tt_linear_forward.1} parent=0
    _
  %s6 = ssub.s32 1, %s4
  %s7 = scalar_select 0, %s6, %s4
  loop: start=0, step=1, limit=4
  $region2: #{tt_linear_forward.1} parent=0 // loop_pre_header
    _
  $region3: #{tt_linear_forward.1} parent=0 // loop_header
    %s9 = sphi 0, %s13
    %p10 = scmp.ge.s32.totalorder %s9, 4
    %s19 = sphi 0, %s21
    %s22 = sphi 0, %s19
    %s23 = sphi 0, %s22
    %s39 = sphi 0, %s23
    %s43 = sphi 0, %s43
    %s45 = sphi 0, %s43
    %s46 = sphi 0, %s45
    %s60 = sphi 0, %s46
    %s64 = sphi 0, %s64
    %s66 = sphi 0, %s64
    %s67 = sphi 0, %s66
    %s81 = sphi 0, %s67
    %s87 = sphi 0, %s89
    %s90 = sphi 0, %s87
    %s91 = sphi 0, %s90
    %s107 = sphi 0, %s91
  $region4: #{tt_linear_forward.1} parent=0 // loop_header_branch
    %12 = sbr.rel (%p10) target = $region8
  $region5: #{tt_linear_forward.1} parent=0 // loop_body
    %s14 = ssub.s32 %s9, 1
    %s15 = ssub.s32 %s9, 2
    %s16 = sadd.s32 %s9, 1
    %s17 = ssub.s32 %s9, %s16
    %p18 = scmp.eq.s32.totalorder %s17, 0
    %s20 = sadd.s32 %s19, 1
    %s21 = scalar_select %p18, %s19, %s20
    %p24 = pneg %p18
    %p25 = scmp.eq.s32.totalorder %s9, 1
    %p26 = por %p24, %p25
    %p27 = scmp.ne.s32.totalorder %s19, %s22
    %p28 = scmp.eq.s32.totalorder %s9, 0
    %p29 = por %p27, %p28
    %p30 = scmp.ne.s32.totalorder %s19, %s22
    %p31 = scmp.eq.s32.totalorder %s14, 1
    %p32 = por %p30, %p31
    %p33 = scmp.ne.s32.totalorder %s22, %s23
    %p34 = scmp.eq.s32.totalorder %s14, 0
    %p35 = por %p33, %p34
    %p36 = scmp.ne.s32.totalorder %s22, %s23
    %p37 = scmp.eq.s32.totalorder %s15, 1
    %p38 = por %p36, %p37
    %p40 = scmp.ne.s32.totalorder %s23, %s39
    %p41 = scmp.eq.s32.totalorder %s15, 0
    %p42 = por %p40, %p41
    %s44 = sadd.s32 %s43, 1
    %p47 = scmp.eq.s32.totalorder %s9, 1
    %p48 = scmp.ne.s32.totalorder %s43, %s45
    %p49 = scmp.eq.s32.totalorder %s9, 0
    %p50 = por %p48, %p49
    %p51 = scmp.ne.s32.totalorder %s43, %s45
    %p52 = scmp.eq.s32.totalorder %s14, 1
    %p53 = por %p51, %p52
    %p54 = scmp.ne.s32.totalorder %s45, %s46
    %p55 = scmp.eq.s32.totalorder %s14, 0
    %p56 = por %p54, %p55
    %p57 = scmp.ne.s32.totalorder %s45, %s46
    %p58 = scmp.eq.s32.totalorder %s15, 1
    %p59 = por %p57, %p58
    %p61 = scmp.ne.s32.totalorder %s46, %s60
    %p62 = scmp.eq.s32.totalorder %s15, 0
    %p63 = por %p61, %p62
    %s65 = sadd.s32 %s64, 1
    %p68 = scmp.eq.s32.totalorder %s9, 1
    %p69 = scmp.ne.s32.totalorder %s64, %s66
    %p70 = scmp.eq.s32.totalorder %s9, 0
    %p71 = por %p69, %p70
    %p72 = scmp.ne.s32.totalorder %s64, %s66
    %p73 = scmp.eq.s32.totalorder %s14, 1
    %p74 = por %p72, %p73
    %p75 = scmp.ne.s32.totalorder %s66, %s67
    %p76 = scmp.eq.s32.totalorder %s14, 0
    %p77 = por %p75, %p76
    %p78 = scmp.ne.s32.totalorder %s66, %s67
    %p79 = scmp.eq.s32.totalorder %s15, 1
    %p80 = por %p78, %p79
    %p82 = scmp.ne.s32.totalorder %s67, %s81
    %p83 = scmp.eq.s32.totalorder %s15, 0
    %p84 = por %p82, %p83
    %s85 = ssub.s32 %s9, %s16
    %p86 = scmp.eq.s32.totalorder %s85, 0
    %s88 = sadd.s32 %s87, 1
    %s89 = scalar_select %p86, %s87, %s88
    %p92 = pneg %p86
    %p93 = scmp.eq.s32.totalorder %s9, 1
    %p94 = por %p92, %p93
    %p95 = scmp.ne.s32.totalorder %s87, %s90
    %p96 = scmp.eq.s32.totalorder %s9, 0
    %p97 = por %p95, %p96
    %p98 = scmp.ne.s32.totalorder %s87, %s90
    %p99 = scmp.eq.s32.totalorder %s14, 1
    %p100 = por %p98, %p99
    %p101 = scmp.ne.s32.totalorder %s90, %s91
    %p102 = scmp.eq.s32.totalorder %s14, 0
    %p103 = por %p101, %p102
    %p104 = scmp.ne.s32.totalorder %s90, %s91
    %p105 = scmp.eq.s32.totalorder %s15, 1
    %p106 = por %p104, %p105
    %p108 = scmp.ne.s32.totalorder %s91, %s107
    %p109 = scmp.eq.s32.totalorder %s15, 0
    %p110 = por %p108, %p109
    %p111 = scmp.le.s32.totalorder 1, %s9
    %p112 = scmp.lt.s32.totalorder %s9, 3
    %p113 = pnand %p111, %p112
    %p114 = pneg %p113
    // Predicated region
    $region9: #{tt_linear_forward.1} parent=5 // pred_check
      _
    $region10: #{tt_linear_forward.1} parent=5 // pred_check_branch
      %116 = sbr.rel (%p113) target = $region12
    $region11: #{tt_linear_forward.1} parent=5 // pred_region
      %s117 = ssub.s32 %s9, 1
      // Predicated region
      $region13: #{tt_linear_forward.1} parent=11 // pred_check
        %p118 = pneg %p56
      $region14: #{tt_linear_forward.1} parent=11 // pred_check_branch
        %120 = sbr.rel (%p118) target = $region16
      $region15: #{tt_linear_forward.1} parent=11 // pred_region
        _
      $region16: #{tt_linear_forward.1} parent=11 // pred_fallthru
        _
      // Predicated region
      $region17: #{tt_linear_forward.1} parent=11 // pred_check
        %p121 = pneg %p77
      $region18: #{tt_linear_forward.1} parent=11 // pred_check_branch
        %123 = sbr.rel (%p121) target = $region20
      $region19: #{tt_linear_forward.1} parent=11 // pred_region
        _
      $region20: #{tt_linear_forward.1} parent=11 // pred_fallthru
        _
    $region12: #{tt_linear_forward.1} parent=5 // pred_fallthru
      _
    %p124 = scmp.lt.s32.totalorder %s9, 2
    // Predicated region
    $region21: #{tt_linear_forward.1} parent=5 // pred_check
      %p125 = pneg %p124
    $region22: #{tt_linear_forward.1} parent=5 // pred_check_branch
      %127 = sbr.rel (%p125) target = $region24
    $region23: #{tt_linear_forward.1} parent=5 // pred_region
      // Predicated region
      $region25: #{tt_linear_forward.1} parent=23 // pred_check
        %p128 = pneg %p29
      $region26: #{tt_linear_forward.1} parent=23 // pred_check_branch
        %130 = sbr.rel (%p128) target = $region28
      $region27: #{tt_linear_forward.1} parent=23 // pred_region
        %s131 = smul.u32 4, %s9
        %p132 = scmp.lt.s32.totalorder %s131, 7
        %s133 = scalar_select %p132, %s131, 7
        %s134 = smul.addr %s133, 2
        %s135 = smul.addr %s134, 8
        %s136 = scalar_lea.vmem %s0, %s135
        %s137 = smul.u32 4, %s9
      $region28: #{tt_linear_forward.1} parent=23 // pred_fallthru
        _
    $region24: #{tt_linear_forward.1} parent=5 // pred_fallthru
      _
    %p138 = scmp.le.s32.totalorder 1, %s9
    %p139 = scmp.lt.s32.totalorder %s9, 3
    %p140 = pnand %p138, %p139
    %p141 = pneg %p140
    // Predicated region
    $region29: #{tt_linear_forward.1} parent=5 // pred_check
      _
    $region30: #{tt_linear_forward.1} parent=5 // pred_check_branch
      %143 = sbr.rel (%p140) target = $region32
    $region31: #{tt_linear_forward.1} parent=5 // pred_region
      %s144 = ssub.s32 %s9, 1
      %s145 = smul.u32 4, %s14
      %p146 = scmp.lt.s32.totalorder %s145, 7
      %s147 = scalar_select %p146, %s145, 7
      %s148 = smul.addr %s147, 2
      %s149 = smul.addr %s148, 8
      %s150 = scalar_lea.vmem %s0, %s149
      %p151 = pneg %p35
      %p152 = pneg %p32
      %p153 = pneg %p56
      %p154 = pneg %p53
      %p155 = pneg %p77
      %p156 = pneg %p74
      %p157 = pneg %p103
      %p158 = pneg %p100
      %s159 = smul.u32 4, %s14
      %p160 = scmp.lt.s32.totalorder %s159, 7
      %s161 = scalar_select %p160, %s159, 7
      %s162 = smul.addr %s161, 8
      %s163 = scalar_lea.vmem %s3, %s162
      %s164 = smul.u32 4, %s14
      %p165 = scmp.lt.s32.totalorder %s164, 7
      %s166 = scalar_select %p165, %s164, 7
      %s167 = smul.addr %s166, 2
      %s168 = smul.addr %s167, 8
      %s169 = scalar_lea.vmem %s0, %s168
      %s170 = smul.u32 4, %s14
      %s171 = smul.u32 4, %s14
      %p172 = scmp.lt.s32.totalorder %s171, 7
      %s173 = scalar_select %p172, %s171, 7
      %s174 = smul.addr %s173, 8
      %s175 = scalar_lea.vmem %s3, %s174
      %s176 = smul.u32 4, %s14
      %v177 = vld [vmem:[%s169] sm:$0xff]
      %v178 = vld [vmem:[%s169 + $0x8] sm:$0xff]
      %v179 = vld [vmem:[%s169 + $0x10] sm:$0xff]
      %v180 = vld [vmem:[%s169 + $0x18] sm:$0xff]
      %v181 = vld [vmem:[%s169 + $0x20] sm:$0xff]
      %v182 = vld [vmem:[%s169 + $0x28] sm:$0xff]
      %v183 = vld [vmem:[%s169 + $0x30] sm:$0xff]
      %v184 = vld [vmem:[%s169 + $0x38] sm:$0xff]
      %v185 = vld [vmem:[%s1] sm:$0xff]
      %v186 = vld [vmem:[%s1 + $0x8] sm:$0xff]
      %v187 = vld [vmem:[%s1 + $0x10] sm:$0xff]
      %v188 = vld [vmem:[%s1 + $0x18] sm:$0xff]
      %v189 = vld [vmem:[%s1 + $0x20] sm:$0xff]
      %v190 = vld [vmem:[%s1 + $0x28] sm:$0xff]
      %v191 = vld [vmem:[%s1 + $0x30] sm:$0xff]
      %v192 = vld [vmem:[%s1 + $0x38] sm:$0xff]
      %v193 = vld [vmem:[%s1 + $0x40] sm:$0xff]
      %v194 = vld [vmem:[%s1 + $0x48] sm:$0xff]
      %v195 = vld [vmem:[%s1 + $0x50] sm:$0xff]
      %v196 = vld [vmem:[%s1 + $0x58] sm:$0xff]
      %v197 = vld [vmem:[%s1 + $0x60] sm:$0xff]
      %v198 = vld [vmem:[%s1 + $0x68] sm:$0xff]
      %v199 = vld [vmem:[%s1 + $0x70] sm:$0xff]
      %v200 = vld [vmem:[%s1 + $0x78] sm:$0xff]
      %v201 = vld [vmem:[%s1 + $0x80] sm:$0xff]
      %v202 = vld [vmem:[%s1 + $0x88] sm:$0xff]
      %v203 = vld [vmem:[%s1 + $0x90] sm:$0xff]
      %v204 = vld [vmem:[%s1 + $0x98] sm:$0xff]
      %v205 = vld [vmem:[%s1 + $0xa0] sm:$0xff]
      %v206 = vld [vmem:[%s1 + $0xa8] sm:$0xff]
      %v207 = vld [vmem:[%s1 + $0xb0] sm:$0xff]
      %v208 = vld [vmem:[%s1 + $0xb8] sm:$0xff]
      %v209 = vld [vmem:[%s1 + $0xc0] sm:$0xff]
      %v210 = vld [vmem:[%s1 + $0xc8] sm:$0xff]
      %v211 = vld [vmem:[%s1 + $0xd0] sm:$0xff]
      %v212 = vld [vmem:[%s1 + $0xd8] sm:$0xff]
      %v213 = vld [vmem:[%s1 + $0xe0] sm:$0xff]
      %v214 = vld [vmem:[%s1 + $0xe8] sm:$0xff]
      %v215 = vld [vmem:[%s1 + $0xf0] sm:$0xff]
      %v216 = vld [vmem:[%s1 + $0xf8] sm:$0xff]
      %v217 = vld [vmem:[%s2] sm:$0x1]
      %v219 = vlaneseq
      %v220 = vshrl.u32 %v219, 7
      %v221 = vsub.s32 0, %v220
      %v222 = vrot.slane %v217, %v221
      %224 = vmatprep.subr.mxu0 0.0
      %225 = vmatpush1.msra.mxu0 %v200
      %226 = vmatprep.subr.mxu0 0.0
      %227 = vmatpush1.msra.mxu0 %v199
      %228 = vmatprep.subr.mxu0 0.0
      %229 = vmatpush1.msra.mxu0 %v198
      %230 = vmatprep.subr.mxu0 0.0
      %231 = vmatpush1.msra.mxu0 %v197
      %232 = vmatprep.subr.mxu0 0.0
      %233 = vmatpush1.msra.mxu0 %v196
      %234 = vmatprep.subr.mxu0 0.0
      %235 = vmatpush1.msra.mxu0 %v195
      %236 = vmatprep.subr.mxu0 0.0
      %237 = vmatpush1.msra.mxu0 %v194
      %238 = vmatprep.subr.mxu0 0.0
      %239 = vmatpush1.msra.mxu0 %v193
      %240 = vmatprep.subr.mxu0 0.0
      %241 = vmatpush1.msra.mxu0 %v192
      %242 = vmatprep.subr.mxu0 0.0
      %243 = vmatpush1.msra.mxu0 %v191
      %244 = vmatprep.subr.mxu0 0.0
      %245 = vmatpush1.msra.mxu0 %v190
      %246 = vmatprep.subr.mxu0 0.0
      %247 = vmatpush1.msra.mxu0 %v189
      %248 = vmatprep.subr.mxu0 0.0
      %249 = vmatpush1.msra.mxu0 %v188
      %250 = vmatprep.subr.mxu0 0.0
      %251 = vmatpush1.msra.mxu0 %v187
      %252 = vmatprep.subr.mxu0 0.0
      %253 = vmatpush1.msra.mxu0 %v186
      %254 = vmatprep.subr.mxu0 0.0
      %255 = vmatpush1.msra.mxu0 %v185
      %256 = vmatprep.subr.mxu0 0.0
      %257 = vmatpush2.msra.mxu0 %v216
      %258 = vmatprep.subr.mxu0 0.0
      %259 = vmatpush2.msra.mxu0 %v215
      %260 = vmatprep.subr.mxu0 0.0
      %261 = vmatpush2.msra.mxu0 %v214
      %262 = vmatprep.subr.mxu0 0.0
      %263 = vmatpush2.msra.mxu0 %v213
      %264 = vmatprep.subr.mxu0 0.0
      %265 = vmatpush2.msra.mxu0 %v212
      %266 = vmatprep.subr.mxu0 0.0
      %267 = vmatpush2.msra.mxu0 %v211
      %268 = vmatprep.subr.mxu0 0.0
      %269 = vmatpush2.msra.mxu0 %v210
      %270 = vmatprep.subr.mxu0 0.0
      %271 = vmatpush2.msra.mxu0 %v209
      %272 = vmatprep.subr.mxu0 0.0
      %273 = vmatpush2.msra.mxu0 %v208
      %274 = vmatprep.subr.mxu0 0.0
      %275 = vmatpush2.msra.mxu0 %v207
      %276 = vmatprep.subr.mxu0 0.0
      %277 = vmatpush2.msra.mxu0 %v206
      %278 = vmatprep.subr.mxu0 0.0
      %279 = vmatpush2.msra.mxu0 %v205
      %280 = vmatprep.subr.mxu0 0.0
      %281 = vmatpush2.msra.mxu0 %v204
      %282 = vmatprep.subr.mxu0 0.0
      %283 = vmatpush2.msra.mxu0 %v203
      %284 = vmatprep.subr.mxu0 0.0
      %285 = vmatpush2.msra.mxu0 %v202
      %286 = vmatprep.subr.mxu0 0.0
      %287 = vmatpush2.msra.mxu0 %v201
      %288 = vmatprep.mubr.f32.mxu0 %v178
      %289 = vmatmul.mubr.f32.gmra.mxu0 %v177
      %v290 = vpop.f32.mrf.mxu0
      %v291 = vadd.f32 %v222, %v290
      %v292 = vpop.f32.mrf.mxu0
      %293 = vmatprep.mubr.f32.mxu0 %v180
      %294 = vmatmul.mubr.f32.gmra.mxu0 %v179
      %v295 = vpop.f32.mrf.mxu0
      %v296 = vadd.f32 %v222, %v295
      %v297 = vpop.f32.mrf.mxu0
      %298 = vmatprep.mubr.f32.mxu0 %v182
      %299 = vmatmul.mubr.f32.gmra.mxu0 %v181
      %v300 = vpop.f32.mrf.mxu0
      %v301 = vadd.f32 %v222, %v300
      %v302 = vpop.f32.mrf.mxu0
      %303 = vmatprep.mubr.f32.mxu0 %v184
      %304 = vmatmul.mubr.f32.gmra.mxu0 %v183
      %v305 = vpop.f32.mrf.mxu0
      %v306 = vadd.f32 %v222, %v305
      %v307 = vpop.f32.mrf.mxu0
      %308 = vdwg.mxu0
      %309 = vst [vmem:[%s175] sm:$0xff] %v291
      %310 = vst [vmem:[%s175 + $0x8] sm:$0xff] %v296
      %311 = vst [vmem:[%s175 + $0x10] sm:$0xff] %v301
      %312 = vst [vmem:[%s175 + $0x18] sm:$0xff] %v306
      %s313 = smul.u32 4, %s14
      %p314 = scmp.lt.s32.totalorder %s313, 7
      %s315 = scalar_select %p314, %s313, 7
      %s316 = smul.addr %s315, 8
      %s317 = scalar_lea.vmem %s3, %s316
      // Predicated region
      $region33: #{tt_linear_forward.1} parent=31 // pred_check
        %p318 = pneg %p100
      $region34: #{tt_linear_forward.1} parent=31 // pred_check_branch
        %320 = sbr.rel (%p318) target = $region36
      $region35: #{tt_linear_forward.1} parent=31 // pred_region
        %s321 = smul.u32 4, %s14
      $region36: #{tt_linear_forward.1} parent=31 // pred_fallthru
        _
    $region32: #{tt_linear_forward.1} parent=5 // pred_fallthru
      _
    %p322 = scmp.le.s32.totalorder 2, %s9
    // Predicated region
    $region37: #{tt_linear_forward.1} parent=5 // pred_check
      %p323 = pneg %p322
    $region38: #{tt_linear_forward.1} parent=5 // pred_check_branch
      %325 = sbr.rel (%p323) target = $region40
    $region39: #{tt_linear_forward.1} parent=5 // pred_region
      %s326 = ssub.s32 %s9, 2
      // Predicated region
      $region41: #{tt_linear_forward.1} parent=39 // pred_check
        %p327 = pneg %p106
      $region42: #{tt_linear_forward.1} parent=39 // pred_check_branch
        %329 = sbr.rel (%p327) target = $region44
      $region43: #{tt_linear_forward.1} parent=39 // pred_region
        %s330 = smul.u32 4, %s15
        %p331 = scmp.lt.s32.totalorder %s330, 7
        %s332 = scalar_select %p331, %s330, 7
        %s333 = smul.addr %s332, 8
        %s334 = scalar_lea.vmem %s3, %s333
      $region44: #{tt_linear_forward.1} parent=39 // pred_fallthru
        _
    $region40: #{tt_linear_forward.1} parent=5 // pred_fallthru
      _
  $region6: #{tt_linear_forward.1} parent=0 // loop_footer
    %s13 = sadd.s32 1, %s9
  $region7: #{tt_linear_forward.1} parent=0 // loop_footer_branch
    %8 = sbr.rel target = $region3
  $region8: #{tt_linear_forward.1} parent=0 // loop_exit
    _

</llo_original>
